<compile_context>
chip_gen: v7x
topology: tpu7x:2x2x1
jax: 0.10.0
libtpu: 0.0.40
codegen_flags: <defaults>
</compile_context>

<pallas_src>
import functools

import jax
import jax.numpy as jnp
from jax.experimental import pallas as pl
from jax.experimental.pallas import tpu as pltpu


def _rnn_kernel(x_ref, w_ih_t_ref, w_hh_t_ref, b_ref, w_out_t_ref, b_out_ref,
                y_ref, h_all_ref, *, T, B, H):
    # ---- Batched input projection (time-independent): one MXU matmul. ----
    # Kept as a register/VMEM *value* (T*B*H f32 = 8 KiB total) so the serial
    # recurrence never reads the pre-activations back from VMEM.
    pre_all = (
        jnp.dot(x_ref[...], w_ih_t_ref[...],
                preferred_element_type=jnp.float32)
        + b_ref[...]
    )

    w_hh_t = w_hh_t_ref[...]  # (H, H): loaded once, no in-loop transpose.

    # ---- Sequential recurrence: only (B,H)@(H,H) + tanh per step. ----
    # Static Python loop => static slices of the register-resident slab and
    # static, sublane-aligned, WRITE-ONLY stores into the hidden scratch.
    h = jnp.zeros((B, H), jnp.float32)
    for t in range(T):
        pre_t = pre_all[t * B:(t + 1) * B, :]
        h = jnp.tanh(pre_t + jnp.dot(h, w_hh_t,
                                     preferred_element_type=jnp.float32))
        h_all_ref[pl.ds(t * B, B), :] = h

    # ---- Batched output projection: one MXU matmul, one dense store. ----
    y_ref[...] = (
        jnp.dot(h_all_ref[...], w_out_t_ref[...],
                preferred_element_type=jnp.float32)
        + b_out_ref[...]
    ).astype(y_ref.dtype)


def vanilla_rnn_forward(x, w_ih, w_hh, b_ih, b_hh, w_out, b_out):
    """x: (T, B, D) float32.  Returns (T, B, O) float32."""
    T, B, D = x.shape
    H = w_ih.shape[0]
    O = w_out.shape[0]

    # Pre-transpose weights and pre-sum the two RNN biases in XLA (once),
    # so the kernel never transposes and adds one bias instead of two.
    x2 = x.reshape(T * B, D)
    w_ih_t = w_ih.T                      # (D, H)
    w_hh_t = w_hh.T                      # (H, H)
    w_out_t = w_out.T                    # (H, O)
    b = (b_ih + b_hh).reshape(1, H)      # (1, H)
    b_out2 = b_out.reshape(1, O)         # (1, O)

    kernel = functools.partial(_rnn_kernel, T=T, B=B, H=H)
    vmem_spec = pl.BlockSpec(memory_space=pltpu.MemorySpace.VMEM)

    y2 = pl.pallas_call(
        kernel,
        out_shape=jax.ShapeDtypeStruct((T * B, O), jnp.float32),
        in_specs=[vmem_spec] * 6,
        out_specs=vmem_spec,
        scratch_shapes=[pltpu.VMEM((T * B, H), jnp.float32)],
    )(x2, w_ih_t, w_hh_t, b, w_out_t, b_out2)

    return y2.reshape(T, B, O)


def _reference(x, w_ih, w_hh, b_ih, b_hh, w_out, b_out):
    T, B, D = x.shape
    H = w_ih.shape[0]

    def step(h, x_t):
        h_new = jnp.tanh(x_t @ w_ih.T + b_ih + h @ w_hh.T + b_hh)
        return h_new, h_new

    h0 = jnp.zeros((B, H), jnp.float32)
    _, hs = jax.lax.scan(step, h0, x)
    return hs @ w_out.T + b_out


if __name__ == "__main__":
    # Small shapes implied by the module: seq=8, batch=8, input_dim=16,
    # hidden_dim=32, output_dim=8, num_layers=1.
    T, B, D, H, O = 8, 8, 16, 32, 8

    key = jax.random.PRNGKey(0)
    ks = jax.random.split(key, 7)
    scale_rnn = 1.0 / jnp.sqrt(H)
    scale_lin = 1.0 / jnp.sqrt(H)

    x = jax.random.normal(ks[0], (T, B, D), jnp.float32)
    w_ih = jax.random.uniform(ks[1], (H, D), jnp.float32, -scale_rnn, scale_rnn)
    w_hh = jax.random.uniform(ks[2], (H, H), jnp.float32, -scale_rnn, scale_rnn)
    b_ih = jax.random.uniform(ks[3], (H,), jnp.float32, -scale_rnn, scale_rnn)
    b_hh = jax.random.uniform(ks[4], (H,), jnp.float32, -scale_rnn, scale_rnn)
    w_out = jax.random.uniform(ks[5], (O, H), jnp.float32, -scale_lin, scale_lin)
    b_out = jax.random.uniform(ks[6], (O,), jnp.float32, -scale_lin, scale_lin)

    y = vanilla_rnn_forward(x, w_ih, w_hh, b_ih, b_hh, w_out, b_out)
    y = jax.block_until_ready(y)

    y_ref = _reference(x, w_ih, w_hh, b_ih, b_hh, w_out, b_out)
    assert jnp.allclose(y, y_ref, atol=1e-5, rtol=1e-5), "mismatch vs JAX reference"

    # TODO(synk): output_activation defaults to None in the module; if one is
    # passed via kwargs it would be applied element-wise on y outside the kernel.
    print("KERNEL_OK")
</pallas_src>

<mosaic_0001>
module attributes {stable_mosaic.version = 11 : i64} {
  func.func @_rnn_kernel(%arg0: memref<64x16xf32, #tpu.memory_space<vmem>>, %arg1: memref<16x32xf32, #tpu.memory_space<vmem>>, %arg2: memref<32x32xf32, #tpu.memory_space<vmem>>, %arg3: memref<1x32xf32, #tpu.memory_space<vmem>>, %arg4: memref<32x8xf32, #tpu.memory_space<vmem>>, %arg5: memref<1x8xf32, #tpu.memory_space<vmem>>, %arg6: memref<64x8xf32, #tpu.memory_space<vmem>>, %arg7: memref<64x32xf32, #tpu.memory_space<vmem>>) attributes {dimension_semantics = [], scalar_prefetch = 0 : i64, scratch_operands = 1 : i64, tpu.core_type = #tpu.core_type<tc>} {
    %c0 = arith.constant 0 : index
    %c0_0 = arith.constant 0 : index
    %0 = vector.load %arg0[%c0, %c0_0] : memref<64x16xf32, #tpu.memory_space<vmem>>, vector<64x16xf32>
    %c0_1 = arith.constant 0 : index
    %c0_2 = arith.constant 0 : index
    %1 = vector.load %arg1[%c0_1, %c0_2] : memref<16x32xf32, #tpu.memory_space<vmem>>, vector<16x32xf32>
    %cst = arith.constant dense<0.000000e+00> : vector<64x32xf32>
    %2 = tpu.matmul %0, %1, %cst {dimension_numbers = #tpu.dot_dimension_numbers<[1], [0], [0], [1], [0, 0, 1, 1], [], []>} : vector<64x16xf32>, vector<16x32xf32>, vector<64x32xf32> -> vector<64x32xf32>
    %c0_3 = arith.constant 0 : index
    %c0_4 = arith.constant 0 : index
    %3 = vector.load %arg3[%c0_3, %c0_4] : memref<1x32xf32, #tpu.memory_space<vmem>>, vector<1x32xf32>
    %4 = vector.broadcast %3 : vector<1x32xf32> to vector<64x32xf32>
    %5 = arith.addf %2, %4 : vector<64x32xf32>
    %c0_5 = arith.constant 0 : index
    %c0_6 = arith.constant 0 : index
    %6 = vector.load %arg2[%c0_5, %c0_6] : memref<32x32xf32, #tpu.memory_space<vmem>>, vector<32x32xf32>
    %cst_7 = arith.constant 0.000000e+00 : f32
    %7 = vector.broadcast %cst_7 : f32 to vector<8x32xf32>
    %8 = vector.extract_strided_slice %5 {offsets = [0, 0], sizes = [8, 32], strides = [1, 1]} : vector<64x32xf32> to vector<8x32xf32>
    %cst_8 = arith.constant dense<0.000000e+00> : vector<8x32xf32>
    %9 = tpu.matmul %7, %6, %cst_8 {dimension_numbers = #tpu.dot_dimension_numbers<[1], [0], [0], [1], [0, 0, 1, 1], [], []>} : vector<8x32xf32>, vector<32x32xf32>, vector<8x32xf32> -> vector<8x32xf32>
    %10 = arith.addf %8, %9 : vector<8x32xf32>
    %11 = math.tanh %10 : vector<8x32xf32>
    %c0_9 = arith.constant 0 : index
    %c0_10 = arith.constant 0 : index
    %12 = vector.load %arg7[%c0_9, %c0_10] : memref<64x32xf32, #tpu.memory_space<vmem>>, vector<8x32xf32>
    tpu.vector_store %arg7[%c0_9, %c0_10], %11 {strides = array<i32>} : memref<64x32xf32, #tpu.memory_space<vmem>>, vector<8x32xf32>,
    %13 = vector.extract_strided_slice %5 {offsets = [8, 0], sizes = [8, 32], strides = [1, 1]} : vector<64x32xf32> to vector<8x32xf32>
    %cst_11 = arith.constant dense<0.000000e+00> : vector<8x32xf32>
    %14 = tpu.matmul %11, %6, %cst_11 {dimension_numbers = #tpu.dot_dimension_numbers<[1], [0], [0], [1], [0, 0, 1, 1], [], []>} : vector<8x32xf32>, vector<32x32xf32>, vector<8x32xf32> -> vector<8x32xf32>
    %15 = arith.addf %13, %14 : vector<8x32xf32>
    %16 = math.tanh %15 : vector<8x32xf32>
    %c8 = arith.constant 8 : index
    %c0_12 = arith.constant 0 : index
    %17 = vector.load %arg7[%c8, %c0_12] : memref<64x32xf32, #tpu.memory_space<vmem>>, vector<8x32xf32>
    tpu.vector_store %arg7[%c8, %c0_12], %16 {strides = array<i32>} : memref<64x32xf32, #tpu.memory_space<vmem>>, vector<8x32xf32>,
    %18 = vector.extract_strided_slice %5 {offsets = [16, 0], sizes = [8, 32], strides = [1, 1]} : vector<64x32xf32> to vector<8x32xf32>
    %cst_13 = arith.constant dense<0.000000e+00> : vector<8x32xf32>
    %19 = tpu.matmul %16, %6, %cst_13 {dimension_numbers = #tpu.dot_dimension_numbers<[1], [0], [0], [1], [0, 0, 1, 1], [], []>} : vector<8x32xf32>, vector<32x32xf32>, vector<8x32xf32> -> vector<8x32xf32>
    %20 = arith.addf %18, %19 : vector<8x32xf32>
    %21 = math.tanh %20 : vector<8x32xf32>
    %c16 = arith.constant 16 : index
    %c0_14 = arith.constant 0 : index
    %22 = vector.load %arg7[%c16, %c0_14] : memref<64x32xf32, #tpu.memory_space<vmem>>, vector<8x32xf32>
    tpu.vector_store %arg7[%c16, %c0_14], %21 {strides = array<i32>} : memref<64x32xf32, #tpu.memory_space<vmem>>, vector<8x32xf32>,
    %23 = vector.extract_strided_slice %5 {offsets = [24, 0], sizes = [8, 32], strides = [1, 1]} : vector<64x32xf32> to vector<8x32xf32>
    %cst_15 = arith.constant dense<0.000000e+00> : vector<8x32xf32>
    %24 = tpu.matmul %21, %6, %cst_15 {dimension_numbers = #tpu.dot_dimension_numbers<[1], [0], [0], [1], [0, 0, 1, 1], [], []>} : vector<8x32xf32>, vector<32x32xf32>, vector<8x32xf32> -> vector<8x32xf32>
    %25 = arith.addf %23, %24 : vector<8x32xf32>
    %26 = math.tanh %25 : vector<8x32xf32>
    %c24 = arith.constant 24 : index
    %c0_16 = arith.constant 0 : index
    %27 = vector.load %arg7[%c24, %c0_16] : memref<64x32xf32, #tpu.memory_space<vmem>>, vector<8x32xf32>
    tpu.vector_store %arg7[%c24, %c0_16], %26 {strides = array<i32>} : memref<64x32xf32, #tpu.memory_space<vmem>>, vector<8x32xf32>,
    %28 = vector.extract_strided_slice %5 {offsets = [32, 0], sizes = [8, 32], strides = [1, 1]} : vector<64x32xf32> to vector<8x32xf32>
    %cst_17 = arith.constant dense<0.000000e+00> : vector<8x32xf32>
    %29 = tpu.matmul %26, %6, %cst_17 {dimension_numbers = #tpu.dot_dimension_numbers<[1], [0], [0], [1], [0, 0, 1, 1], [], []>} : vector<8x32xf32>, vector<32x32xf32>, vector<8x32xf32> -> vector<8x32xf32>
    %30 = arith.addf %28, %29 : vector<8x32xf32>
    %31 = math.tanh %30 : vector<8x32xf32>
    %c32 = arith.constant 32 : index
    %c0_18 = arith.constant 0 : index
    %32 = vector.load %arg7[%c32, %c0_18] : memref<64x32xf32, #tpu.memory_space<vmem>>, vector<8x32xf32>
    tpu.vector_store %arg7[%c32, %c0_18], %31 {strides = array<i32>} : memref<64x32xf32, #tpu.memory_space<vmem>>, vector<8x32xf32>,
    %33 = vector.extract_strided_slice %5 {offsets = [40, 0], sizes = [8, 32], strides = [1, 1]} : vector<64x32xf32> to vector<8x32xf32>
    %cst_19 = arith.constant dense<0.000000e+00> : vector<8x32xf32>
    %34 = tpu.matmul %31, %6, %cst_19 {dimension_numbers = #tpu.dot_dimension_numbers<[1], [0], [0], [1], [0, 0, 1, 1], [], []>} : vector<8x32xf32>, vector<32x32xf32>, vector<8x32xf32> -> vector<8x32xf32>
    %35 = arith.addf %33, %34 : vector<8x32xf32>
    %36 = math.tanh %35 : vector<8x32xf32>
    %c40 = arith.constant 40 : index
    %c0_20 = arith.constant 0 : index
    %37 = vector.load %arg7[%c40, %c0_20] : memref<64x32xf32, #tpu.memory_space<vmem>>, vector<8x32xf32>
    tpu.vector_store %arg7[%c40, %c0_20], %36 {strides = array<i32>} : memref<64x32xf32, #tpu.memory_space<vmem>>, vector<8x32xf32>,
    %38 = vector.extract_strided_slice %5 {offsets = [48, 0], sizes = [8, 32], strides = [1, 1]} : vector<64x32xf32> to vector<8x32xf32>
    %cst_21 = arith.constant dense<0.000000e+00> : vector<8x32xf32>
    %39 = tpu.matmul %36, %6, %cst_21 {dimension_numbers = #tpu.dot_dimension_numbers<[1], [0], [0], [1], [0, 0, 1, 1], [], []>} : vector<8x32xf32>, vector<32x32xf32>, vector<8x32xf32> -> vector<8x32xf32>
    %40 = arith.addf %38, %39 : vector<8x32xf32>
    %41 = math.tanh %40 : vector<8x32xf32>
    %c48 = arith.constant 48 : index
    %c0_22 = arith.constant 0 : index
    %42 = vector.load %arg7[%c48, %c0_22] : memref<64x32xf32, #tpu.memory_space<vmem>>, vector<8x32xf32>
    tpu.vector_store %arg7[%c48, %c0_22], %41 {strides = array<i32>} : memref<64x32xf32, #tpu.memory_space<vmem>>, vector<8x32xf32>,
    %43 = vector.extract_strided_slice %5 {offsets = [56, 0], sizes = [8, 32], strides = [1, 1]} : vector<64x32xf32> to vector<8x32xf32>
    %cst_23 = arith.constant dense<0.000000e+00> : vector<8x32xf32>
    %44 = tpu.matmul %41, %6, %cst_23 {dimension_numbers = #tpu.dot_dimension_numbers<[1], [0], [0], [1], [0, 0, 1, 1], [], []>} : vector<8x32xf32>, vector<32x32xf32>, vector<8x32xf32> -> vector<8x32xf32>
    %45 = arith.addf %43, %44 : vector<8x32xf32>
    %46 = math.tanh %45 : vector<8x32xf32>
    %c56 = arith.constant 56 : index
    %c0_24 = arith.constant 0 : index
    %47 = vector.load %arg7[%c56, %c0_24] : memref<64x32xf32, #tpu.memory_space<vmem>>, vector<8x32xf32>
    tpu.vector_store %arg7[%c56, %c0_24], %46 {strides = array<i32>} : memref<64x32xf32, #tpu.memory_space<vmem>>, vector<8x32xf32>,
    %c0_25 = arith.constant 0 : index
    %c0_26 = arith.constant 0 : index
    %48 = vector.load %arg7[%c0_25, %c0_26] : memref<64x32xf32, #tpu.memory_space<vmem>>, vector<64x32xf32>
    %c0_27 = arith.constant 0 : index
    %c0_28 = arith.constant 0 : index
    %49 = vector.load %arg4[%c0_27, %c0_28] : memref<32x8xf32, #tpu.memory_space<vmem>>, vector<32x8xf32>
    %cst_29 = arith.constant dense<0.000000e+00> : vector<64x8xf32>
    %50 = tpu.matmul %48, %49, %cst_29 {dimension_numbers = #tpu.dot_dimension_numbers<[1], [0], [0], [1], [0, 0, 1, 1], [], []>} : vector<64x32xf32>, vector<32x8xf32>, vector<64x8xf32> -> vector<64x8xf32>
    %c0_30 = arith.constant 0 : index
    %c0_31 = arith.constant 0 : index
    %51 = vector.load %arg5[%c0_30, %c0_31] : memref<1x8xf32, #tpu.memory_space<vmem>>, vector<1x8xf32>
    %52 = vector.broadcast %51 : vector<1x8xf32> to vector<64x8xf32>
    %53 = arith.addf %50, %52 : vector<64x8xf32>
    %c0_32 = arith.constant 0 : index
    %c0_33 = arith.constant 0 : index
    %54 = vector.load %arg6[%c0_32, %c0_33] : memref<64x8xf32, #tpu.memory_space<vmem>>, vector<64x8xf32>
    tpu.vector_store %arg6[%c0_32, %c0_33], %53 {strides = array<i32>} : memref<64x8xf32, #tpu.memory_space<vmem>>, vector<64x8xf32>,
    return
  }
}

</mosaic_0001>

<llo_original>
// kernel: tpu_custom_call.1
$region0: #{tpu_custom_call.1}
  #allocation0 [shape = 'u32[]', space=smem, size = 0x4, offset = 0x4, fixed_abs, tag = 'smem constant byte address 0x4 - core index']
  #allocation1 [shape = 'u32[144,128]{1,0:T(1,128)}', space=vmem, size = 0x12000, scoped, tag = 'internal scratch']
  #allocation2 [shape = 'f32[64,32]{1,0:T(8,128)}', space=vmem, size = 0x8000, scoped, tag = 'scratch operand']
  %s0 = inlined_call_operand.vmem [shape: f32[64,16], index: 0, kind: input, shape index: {}]
  %s1 = inlined_call_operand.vmem [shape: f32[16,32], index: 1, kind: input, shape index: {}]
  %s2 = inlined_call_operand.vmem [shape: f32[32,32], index: 2, kind: input, shape index: {}]
  %s3 = inlined_call_operand.vmem [shape: f32[1,32], index: 3, kind: input, shape index: {}]
  %s4 = inlined_call_operand.vmem [shape: f32[32,8], index: 4, kind: input, shape index: {}]
  %s5 = inlined_call_operand.vmem [shape: f32[1,8], index: 5, kind: input, shape index: {}]
  %s6 = inlined_call_operand.vmem [shape: f32[64,8], index: 6, kind: output, shape index: {}]
  %s7 = sld [smem:[#allocation0]]
  $region34: #{tpu_custom_call.1} parent=0
    _
  %s9 = ssub.s32 1, %s7
  %s10 = scalar_select 0, %s9, %s7
  // Predicated region
  $region2: #{tpu_custom_call.1} parent=0 // pred_check
    _
  $region3: #{tpu_custom_call.1} parent=0 // pred_check_branch
    %12 = sbr.rel (0) target = $region5
  $region4: #{tpu_custom_call.1} parent=0 // pred_region
    _
  $region5: #{tpu_custom_call.1} parent=0 // pred_fallthru
    _
  // Predicated region
  $region6: #{tpu_custom_call.1} parent=0 // pred_check
    _
  $region7: #{tpu_custom_call.1} parent=0 // pred_check_branch
    %14 = sbr.rel (0) target = $region9
  $region8: #{tpu_custom_call.1} parent=0 // pred_region
    _
  $region9: #{tpu_custom_call.1} parent=0 // pred_fallthru
    _
  // Predicated region
  $region10: #{tpu_custom_call.1} parent=0 // pred_check
    _
  $region11: #{tpu_custom_call.1} parent=0 // pred_check_branch
    %16 = sbr.rel (0) target = $region13
  $region12: #{tpu_custom_call.1} parent=0 // pred_region
    _
  $region13: #{tpu_custom_call.1} parent=0 // pred_fallthru
    _
  // Predicated region
  $region14: #{tpu_custom_call.1} parent=0 // pred_check
    _
  $region15: #{tpu_custom_call.1} parent=0 // pred_check_branch
    %18 = sbr.rel (0) target = $region17
  $region16: #{tpu_custom_call.1} parent=0 // pred_region
    _
  $region17: #{tpu_custom_call.1} parent=0 // pred_fallthru
    _
  // Predicated region
  $region18: #{tpu_custom_call.1} parent=0 // pred_check
    _
  $region19: #{tpu_custom_call.1} parent=0 // pred_check_branch
    %20 = sbr.rel (0) target = $region21
  $region20: #{tpu_custom_call.1} parent=0 // pred_region
    _
  $region21: #{tpu_custom_call.1} parent=0 // pred_fallthru
    _
  // Predicated region
  $region22: #{tpu_custom_call.1} parent=0 // pred_check
    _
  $region23: #{tpu_custom_call.1} parent=0 // pred_check_branch
    %22 = sbr.rel (0) target = $region25
  $region24: #{tpu_custom_call.1} parent=0 // pred_region
    _
  $region25: #{tpu_custom_call.1} parent=0 // pred_fallthru
    _
  %v23 = vld [vmem:[%s0] sm:$0xff]
  %v24 = vld [vmem:[%s0 + $0x8] sm:$0xff]
  %v25 = vld [vmem:[%s0 + $0x10] sm:$0xff]
  %v26 = vld [vmem:[%s0 + $0x18] sm:$0xff]
  %v27 = vld [vmem:[%s0 + $0x20] sm:$0xff]
  %v28 = vld [vmem:[%s0 + $0x28] sm:$0xff]
  %v29 = vld [vmem:[%s0 + $0x30] sm:$0xff]
  %v30 = vld [vmem:[%s0 + $0x38] sm:$0xff]
  %v31 = vld [vmem:[%s1] sm:$0xff]
  %v32 = vld [vmem:[%s1 + $0x8] sm:$0xff]
  %v33 = vld [vmem:[%s3] sm:$0x1]
  %v35 = vlaneseq
  %v36 = vshrl.u32 %v35, 7
  %v37 = vsub.s32 0, %v36
  %v38 = vrot.slane %v33, %v37
  %vm40 = vcmask 130048
  %v42 = vsel %vm40, %v23, 0
  %v45 = vsel %vm40, %v24, 0
  %v48 = vsel %vm40, %v25, 0
  %v51 = vsel %vm40, %v26, 0
  %v54 = vsel %vm40, %v27, 0
  %v57 = vsel %vm40, %v28, 0
  %v60 = vsel %vm40, %v29, 0
  %v63 = vsel %vm40, %v30, 0
  %65 = vmatprep.subr.mxu0 0.0
  %66 = vmatpush1.msra.mxu0 %v31
  %67 = vmatprep.subr.mxu0 0.0
  %68 = vmatpush1.msra.mxu0 %v32
  %69 = vmatprep.subr.mxu0 0.0
  %70 = vmatpush1.msra.mxu0 0.0
  %71 = vmatprep.subr.mxu0 0.0
  %72 = vmatpush1.msra.mxu0 0.0
  %73 = vmatprep.subr.mxu0 0.0
  %74 = vmatpush1.msra.mxu0 0.0
  %75 = vmatprep.subr.mxu0 0.0
  %76 = vmatpush1.msra.mxu0 0.0
  %77 = vmatprep.subr.mxu0 0.0
  %78 = vmatpush1.msra.mxu0 0.0
  %79 = vmatprep.subr.mxu0 0.0
  %80 = vmatpush1.msra.mxu0 0.0
  %81 = vmatprep.subr.mxu0 0.0
  %82 = vmatpush1.msra.mxu0 0.0
  %83 = vmatprep.subr.mxu0 0.0
  %84 = vmatpush1.msra.mxu0 0.0
  %85 = vmatprep.subr.mxu0 0.0
  %86 = vmatpush1.msra.mxu0 0.0
  %87 = vmatprep.subr.mxu0 0.0
  %88 = vmatpush1.msra.mxu0 0.0
  %89 = vmatprep.subr.mxu0 0.0
  %90 = vmatpush1.msra.mxu0 0.0
  %91 = vmatprep.subr.mxu0 0.0
  %92 = vmatpush1.msra.mxu0 0.0
  %93 = vmatprep.subr.mxu0 0.0
  %94 = vmatpush1.msra.mxu0 0.0
  %95 = vmatprep.subr.mxu0 0.0
  %96 = vmatpush1.msra.mxu0 0.0
  %97 = vmatprep.subr.mxu0 0.0
  %98 = vmatpush1.msra.mxu0 0.0
  %99 = vmatprep.subr.mxu0 0.0
  %100 = vmatpush1.msra.mxu0 0.0
  %101 = vmatprep.subr.mxu0 0.0
  %102 = vmatpush1.msra.mxu0 0.0
  %103 = vmatprep.subr.mxu0 0.0
  %104 = vmatpush1.msra.mxu0 0.0
  %105 = vmatprep.subr.mxu0 0.0
  %106 = vmatpush1.msra.mxu0 0.0
  %107 = vmatprep.subr.mxu0 0.0
  %108 = vmatpush1.msra.mxu0 0.0
  %109 = vmatprep.subr.mxu0 0.0
  %110 = vmatpush1.msra.mxu0 0.0
  %111 = vmatprep.subr.mxu0 0.0
  %112 = vmatpush1.msra.mxu0 0.0
  %113 = vmatprep.subr.mxu0 0.0
  %114 = vmatpush1.msra.mxu0 0.0
  %115 = vmatprep.subr.mxu0 0.0
  %116 = vmatpush1.msra.mxu0 0.0
  %117 = vmatprep.subr.mxu0 0.0
  %118 = vmatpush1.msra.mxu0 0.0
  %119 = vmatprep.subr.mxu0 0.0
  %120 = vmatpush1.msra.mxu0 0.0
  %121 = vmatprep.subr.mxu0 0.0
  %122 = vmatpush1.msra.mxu0 0.0
  %123 = vmatprep.subr.mxu0 0.0
  %124 = vmatpush1.msra.mxu0 0.0
  %125 = vmatprep.subr.mxu0 0.0
  %126 = vmatpush1.msra.mxu0 0.0
  %127 = vmatprep.subr.mxu0 0.0
  %128 = vmatpush1.msra.mxu0 0.0
  %129 = vmatprep.mubr.f32.mxu0 0.0
  %130 = vmatmul.mubr.f32.gmra.mrb[0].mxu0 %v42
  %v131 = vpop.f32.mrb[0].mxu0
  %v132 = vadd.f32 %v38, %v131
  %v133 = vpop.f32.mrb[0].mxu0
  %134 = vmatprep.mubr.f32.mxu0 0.0
  %135 = vmatmul.mubr.f32.gmra.mrb[0].mxu0 %v45
  %v136 = vpop.f32.mrb[0].mxu0
  %v137 = vadd.f32 %v38, %v136
  %v138 = vpop.f32.mrb[0].mxu0
  %139 = vmatprep.mubr.f32.mxu0 0.0
  %140 = vmatmul.mubr.f32.gmra.mrb[0].mxu0 %v48
  %v141 = vpop.f32.mrb[0].mxu0
  %v142 = vadd.f32 %v38, %v141
  %v143 = vpop.f32.mrb[0].mxu0
  %144 = vmatprep.mubr.f32.mxu0 0.0
  %145 = vmatmul.mubr.f32.gmra.mrb[0].mxu0 %v51
  %v146 = vpop.f32.mrb[0].mxu0
  %v147 = vadd.f32 %v38, %v146
  %v148 = vpop.f32.mrb[0].mxu0
  %149 = vmatprep.mubr.f32.mxu0 0.0
  %150 = vmatmul.mubr.f32.gmra.mrb[0].mxu0 %v54
  %v151 = vpop.f32.mrb[0].mxu0
  %v152 = vadd.f32 %v38, %v151
  %v153 = vpop.f32.mrb[0].mxu0
  %154 = vmatprep.mubr.f32.mxu0 0.0
  %155 = vmatmul.mubr.f32.gmra.mrb[0].mxu0 %v57
  %v156 = vpop.f32.mrb[0].mxu0
  %v157 = vadd.f32 %v38, %v156
  %v158 = vpop.f32.mrb[0].mxu0
  %159 = vmatprep.mubr.f32.mxu0 0.0
  %160 = vmatmul.mubr.f32.gmra.mrb[0].mxu0 %v60
  %v161 = vpop.f32.mrb[0].mxu0
  %v162 = vadd.f32 %v38, %v161
  %v163 = vpop.f32.mrb[0].mxu0
  %164 = vmatprep.mubr.f32.mxu0 0.0
  %165 = vmatmul.mubr.f32.gmra.mrb[0].mxu0 %v63
  %v166 = vpop.f32.mrb[0].mxu0
  %v167 = vadd.f32 %v38, %v166
  %v168 = vpop.f32.mrb[0].mxu0
  %169 = vdwg.mxu0
  %v170 = vld [vmem:[%s2] sm:$0xff]
  %v171 = vld [vmem:[%s2 + $0x8] sm:$0xff]
  %v172 = vld [vmem:[%s2 + $0x10] sm:$0xff]
  %v173 = vld [vmem:[%s2 + $0x18] sm:$0xff]
  %vm174 = vcmask 261120
  %v176 = vsel %vm174, 0.0, 0
  %178 = vmatprep.subr.mxu0 0.0
  %179 = vmatpush1.msra.mxu0 %v170
  %180 = vmatprep.subr.mxu0 0.0
  %181 = vmatpush1.msra.mxu0 %v171
  %182 = vmatprep.subr.mxu0 0.0
  %183 = vmatpush1.msra.mxu0 %v172
  %184 = vmatprep.subr.mxu0 0.0
  %185 = vmatpush1.msra.mxu0 %v173
  %186 = vmatprep.subr.mxu0 0.0
  %187 = vmatpush1.msra.mxu0 0.0
  %188 = vmatprep.subr.mxu0 0.0
  %189 = vmatpush1.msra.mxu0 0.0
  %190 = vmatprep.subr.mxu0 0.0
  %191 = vmatpush1.msra.mxu0 0.0
  %192 = vmatprep.subr.mxu0 0.0
  %193 = vmatpush1.msra.mxu0 0.0
  %194 = vmatprep.subr.mxu0 0.0
  %195 = vmatpush1.msra.mxu0 0.0
  %196 = vmatprep.subr.mxu0 0.0
  %197 = vmatpush1.msra.mxu0 0.0
  %198 = vmatprep.subr.mxu0 0.0
  %199 = vmatpush1.msra.mxu0 0.0
  %200 = vmatprep.subr.mxu0 0.0
  %201 = vmatpush1.msra.mxu0 0.0
  %202 = vmatprep.subr.mxu0 0.0
  %203 = vmatpush1.msra.mxu0 0.0
  %204 = vmatprep.subr.mxu0 0.0
  %205 = vmatpush1.msra.mxu0 0.0
  %206 = vmatprep.subr.mxu0 0.0
  %207 = vmatpush1.msra.mxu0 0.0
  %208 = vmatprep.subr.mxu0 0.0
  %209 = vmatpush1.msra.mxu0 0.0
  %210 = vmatprep.subr.mxu0 0.0
  %211 = vmatpush1.msra.mxu0 0.0
  %212 = vmatprep.subr.mxu0 0.0
  %213 = vmatpush1.msra.mxu0 0.0
  %214 = vmatprep.subr.mxu0 0.0
  %215 = vmatpush1.msra.mxu0 0.0
  %216 = vmatprep.subr.mxu0 0.0
  %217 = vmatpush1.msra.mxu0 0.0
  %218 = vmatprep.subr.mxu0 0.0
  %219 = vmatpush1.msra.mxu0 0.0
  %220 = vmatprep.subr.mxu0 0.0
  %221 = vmatpush1.msra.mxu0 0.0
  %222 = vmatprep.subr.mxu0 0.0
  %223 = vmatpush1.msra.mxu0 0.0
  %224 = vmatprep.subr.mxu0 0.0
  %225 = vmatpush1.msra.mxu0 0.0
  %226 = vmatprep.subr.mxu0 0.0
  %227 = vmatpush1.msra.mxu0 0.0
  %228 = vmatprep.subr.mxu0 0.0
  %229 = vmatpush1.msra.mxu0 0.0
  %230 = vmatprep.subr.mxu0 0.0
  %231 = vmatpush1.msra.mxu0 0.0
  %232 = vmatprep.subr.mxu0 0.0
  %233 = vmatpush1.msra.mxu0 0.0
  %234 = vmatprep.subr.mxu0 0.0
  %235 = vmatpush1.msra.mxu0 0.0
  %236 = vmatprep.subr.mxu0 0.0
  %237 = vmatpush1.msra.mxu0 0.0
  %238 = vmatprep.subr.mxu0 0.0
  %239 = vmatpush1.msra.mxu0 0.0
  %240 = vmatprep.subr.mxu0 0.0
  %241 = vmatpush1.msra.mxu0 0.0
  %242 = vmatprep.mubr.f32.mxu0 0.0
  %243 = vmatmul.mubr.f32.gmra.mrb[0].mxu0 %v176
  %v244 = vpop.f32.mrb[0].mxu0
  %v245 = vadd.f32 0.0, %v244
  %v246 = vpop.f32.mrb[0].mxu0
  %247 = vdwg.mxu0
  %v248 = vadd.f32 %v132, %v245
  %v249 = vtanh.pop %v248
  %250 = vst.msk [vmem:[#allocation2] sm:$0xff] %vm174, %v249
  %v252 = vsel %vm174, %v249, 0
  %254 = vmatprep.subr.mxu0 0.0
  %255 = vmatpush1.msra.mxu0 %v170
  %256 = vmatprep.subr.mxu0 0.0
  %257 = vmatpush1.msra.mxu0 %v171
  %258 = vmatprep.subr.mxu0 0.0
  %259 = vmatpush1.msra.mxu0 %v172
  %260 = vmatprep.subr.mxu0 0.0
  %261 = vmatpush1.msra.mxu0 %v173
  %262 = vmatprep.subr.mxu0 0.0
  %263 = vmatpush1.msra.mxu0 0.0
  %264 = vmatprep.subr.mxu0 0.0
  %265 = vmatpush1.msra.mxu0 0.0
  %266 = vmatprep.subr.mxu0 0.0
  %267 = vmatpush1.msra.mxu0 0.0
  %268 = vmatprep.subr.mxu0 0.0
  %269 = vmatpush1.msra.mxu0 0.0
  %270 = vmatprep.subr.mxu0 0.0
  %271 = vmatpush1.msra.mxu0 0.0
  %272 = vmatprep.subr.mxu0 0.0
  %273 = vmatpush1.msra.mxu0 0.0
  %274 = vmatprep.subr.mxu0 0.0
  %275 = vmatpush1.msra.mxu0 0.0
  %276 = vmatprep.subr.mxu0 0.0
  %277 = vmatpush1.msra.mxu0 0.0
  %278 = vmatprep.subr.mxu0 0.0
  %279 = vmatpush1.msra.mxu0 0.0
  %280 = vmatprep.subr.mxu0 0.0
  %281 = vmatpush1.msra.mxu0 0.0
  %282 = vmatprep.subr.mxu0 0.0
  %283 = vmatpush1.msra.mxu0 0.0
  %284 = vmatprep.subr.mxu0 0.0
  %285 = vmatpush1.msra.mxu0 0.0
  %286 = vmatprep.subr.mxu0 0.0
  %287 = vmatpush1.msra.mxu0 0.0
  %288 = vmatprep.subr.mxu0 0.0
  %289 = vmatpush1.msra.mxu0 0.0
  %290 = vmatprep.subr.mxu0 0.0
  %291 = vmatpush1.msra.mxu0 0.0
  %292 = vmatprep.subr.mxu0 0.0
  %293 = vmatpush1.msra.mxu0 0.0
  %294 = vmatprep.subr.mxu0 0.0
  %295 = vmatpush1.msra.mxu0 0.0
  %296 = vmatprep.subr.mxu0 0.0
  %297 = vmatpush1.msra.mxu0 0.0
  %298 = vmatprep.subr.mxu0 0.0
  %299 = vmatpush1.msra.mxu0 0.0
  %300 = vmatprep.subr.mxu0 0.0
  %301 = vmatpush1.msra.mxu0 0.0
  %302 = vmatprep.subr.mxu0 0.0
  %303 = vmatpush1.msra.mxu0 0.0
  %304 = vmatprep.subr.mxu0 0.0
  %305 = vmatpush1.msra.mxu0 0.0
  %306 = vmatprep.subr.mxu0 0.0
  %307 = vmatpush1.msra.mxu0 0.0
  %308 = vmatprep.subr.mxu0 0.0
  %309 = vmatpush1.msra.mxu0 0.0
  %310 = vmatprep.subr.mxu0 0.0
  %311 = vmatpush1.msra.mxu0 0.0
  %312 = vmatprep.subr.mxu0 0.0
  %313 = vmatpush1.msra.mxu0 0.0
  %314 = vmatprep.subr.mxu0 0.0
  %315 = vmatpush1.msra.mxu0 0.0
  %316 = vmatprep.subr.mxu0 0.0
  %317 = vmatpush1.msra.mxu0 0.0
  %318 = vmatprep.mubr.f32.mxu0 0.0
  %319 = vmatmul.mubr.f32.gmra.mrb[0].mxu0 %v252
  %v320 = vpop.f32.mrb[0].mxu0
  %v321 = vadd.f32 0.0, %v320
  %v322 = vpop.f32.mrb[0].mxu0
  %323 = vdwg.mxu0
  %v324 = vadd.f32 %v137, %v321
  %v325 = vtanh.pop %v324
  %326 = vst.msk [vmem:[#allocation2 + $0x8] sm:$0xff] %vm174, %v325
  %v328 = vsel %vm174, %v325, 0
  %330 = vmatprep.subr.mxu0 0.0
  %331 = vmatpush1.msra.mxu0 %v170
  %332 = vmatprep.subr.mxu0 0.0
  %333 = vmatpush1.msra.mxu0 %v171
  %334 = vmatprep.subr.mxu0 0.0
  %335 = vmatpush1.msra.mxu0 %v172
  %336 = vmatprep.subr.mxu0 0.0
  %337 = vmatpush1.msra.mxu0 %v173
  %338 = vmatprep.subr.mxu0 0.0
  %339 = vmatpush1.msra.mxu0 0.0
  %340 = vmatprep.subr.mxu0 0.0
  %341 = vmatpush1.msra.mxu0 0.0
  %342 = vmatprep.subr.mxu0 0.0
  %343 = vmatpush1.msra.mxu0 0.0
  %344 = vmatprep.subr.mxu0 0.0
  %345 = vmatpush1.msra.mxu0 0.0
  %346 = vmatprep.subr.mxu0 0.0
  %347 = vmatpush1.msra.mxu0 0.0
  %348 = vmatprep.subr.mxu0 0.0
  %349 = vmatpush1.msra.mxu0 0.0
  %350 = vmatprep.subr.mxu0 0.0
  %351 = vmatpush1.msra.mxu0 0.0
  %352 = vmatprep.subr.mxu0 0.0
  %353 = vmatpush1.msra.mxu0 0.0
  %354 = vmatprep.subr.mxu0 0.0
  %355 = vmatpush1.msra.mxu0 0.0
  %356 = vmatprep.subr.mxu0 0.0
  %357 = vmatpush1.msra.mxu0 0.0
  %358 = vmatprep.subr.mxu0 0.0
  %359 = vmatpush1.msra.mxu0 0.0
  %360 = vmatprep.subr.mxu0 0.0
  %361 = vmatpush1.msra.mxu0 0.0
  %362 = vmatprep.subr.mxu0 0.0
  %363 = vmatpush1.msra.mxu0 0.0
  %364 = vmatprep.subr.mxu0 0.0
  %365 = vmatpush1.msra.mxu0 0.0
  %366 = vmatprep.subr.mxu0 0.0
  %367 = vmatpush1.msra.mxu0 0.0
  %368 = vmatprep.subr.mxu0 0.0
  %369 = vmatpush1.msra.mxu0 0.0
  %370 = vmatprep.subr.mxu0 0.0
  %371 = vmatpush1.msra.mxu0 0.0
  %372 = vmatprep.subr.mxu0 0.0
  %373 = vmatpush1.msra.mxu0 0.0
  %374 = vmatprep.subr.mxu0 0.0
  %375 = vmatpush1.msra.mxu0 0.0
  %376 = vmatprep.subr.mxu0 0.0
  %377 = vmatpush1.msra.mxu0 0.0
  %378 = vmatprep.subr.mxu0 0.0
  %379 = vmatpush1.msra.mxu0 0.0
  %380 = vmatprep.subr.mxu0 0.0
  %381 = vmatpush1.msra.mxu0 0.0
  %382 = vmatprep.subr.mxu0 0.0
  %383 = vmatpush1.msra.mxu0 0.0
  %384 = vmatprep.subr.mxu0 0.0
  %385 = vmatpush1.msra.mxu0 0.0
  %386 = vmatprep.subr.mxu0 0.0
  %387 = vmatpush1.msra.mxu0 0.0
  %388 = vmatprep.subr.mxu0 0.0
  %389 = vmatpush1.msra.mxu0 0.0
  %390 = vmatprep.subr.mxu0 0.0
  %391 = vmatpush1.msra.mxu0 0.0
  %392 = vmatprep.subr.mxu0 0.0
  %393 = vmatpush1.msra.mxu0 0.0
  %394 = vmatprep.mubr.f32.mxu0 0.0
  %395 = vmatmul.mubr.f32.gmra.mrb[0].mxu0 %v328
  %v396 = vpop.f32.mrb[0].mxu0
  %v397 = vadd.f32 0.0, %v396
  %v398 = vpop.f32.mrb[0].mxu0
  %399 = vdwg.mxu0
  %v400 = vadd.f32 %v142, %v397
  %v401 = vtanh.pop %v400
  %402 = vst.msk [vmem:[#allocation2 + $0x10] sm:$0xff] %vm174, %v401
  %v404 = vsel %vm174, %v401, 0
  %406 = vmatprep.subr.mxu0 0.0
  %407 = vmatpush1.msra.mxu0 %v170
  %408 = vmatprep.subr.mxu0 0.0
  %409 = vmatpush1.msra.mxu0 %v171
  %410 = vmatprep.subr.mxu0 0.0
  %411 = vmatpush1.msra.mxu0 %v172
  %412 = vmatprep.subr.mxu0 0.0
  %413 = vmatpush1.msra.mxu0 %v173
  %414 = vmatprep.subr.mxu0 0.0
  %415 = vmatpush1.msra.mxu0 0.0
  %416 = vmatprep.subr.mxu0 0.0
  %417 = vmatpush1.msra.mxu0 0.0
  %418 = vmatprep.subr.mxu0 0.0
  %419 = vmatpush1.msra.mxu0 0.0
  %420 = vmatprep.subr.mxu0 0.0
  %421 = vmatpush1.msra.mxu0 0.0
  %422 = vmatprep.subr.mxu0 0.0
  %423 = vmatpush1.msra.mxu0 0.0
  %424 = vmatprep.subr.mxu0 0.0
  %425 = vmatpush1.msra.mxu0 0.0
  %426 = vmatprep.subr.mxu0 0.0
  %427 = vmatpush1.msra.mxu0 0.0
  %428 = vmatprep.subr.mxu0 0.0
  %429 = vmatpush1.msra.mxu0 0.0
  %430 = vmatprep.subr.mxu0 0.0
  %431 = vmatpush1.msra.mxu0 0.0
  %432 = vmatprep.subr.mxu0 0.0
  %433 = vmatpush1.msra.mxu0 0.0
  %434 = vmatprep.subr.mxu0 0.0
  %435 = vmatpush1.msra.mxu0 0.0
  %436 = vmatprep.subr.mxu0 0.0
  %437 = vmatpush1.msra.mxu0 0.0
  %438 = vmatprep.subr.mxu0 0.0
  %439 = vmatpush1.msra.mxu0 0.0
  %440 = vmatprep.subr.mxu0 0.0
  %441 = vmatpush1.msra.mxu0 0.0
  %442 = vmatprep.subr.mxu0 0.0
  %443 = vmatpush1.msra.mxu0 0.0
  %444 = vmatprep.subr.mxu0 0.0
  %445 = vmatpush1.msra.mxu0 0.0
  %446 = vmatprep.subr.mxu0 0.0
  %447 = vmatpush1.msra.mxu0 0.0
  %448 = vmatprep.subr.mxu0 0.0
  %449 = vmatpush1.msra.mxu0 0.0
  %450 = vmatprep.subr.mxu0 0.0
  %451 = vmatpush1.msra.mxu0 0.0
  %452 = vmatprep.subr.mxu0 0.0
  %453 = vmatpush1.msra.mxu0 0.0
  %454 = vmatprep.subr.mxu0 0.0
  %455 = vmatpush1.msra.mxu0 0.0
  %456 = vmatprep.subr.mxu0 0.0
  %457 = vmatpush1.msra.mxu0 0.0
  %458 = vmatprep.subr.mxu0 0.0
  %459 = vmatpush1.msra.mxu0 0.0
  %460 = vmatprep.subr.mxu0 0.0
  %461 = vmatpush1.msra.mxu0 0.0
  %462 = vmatprep.subr.mxu0 0.0
  %463 = vmatpush1.msra.mxu0 0.0
  %464 = vmatprep.subr.mxu0 0.0
  %465 = vmatpush1.msra.mxu0 0.0
  %466 = vmatprep.subr.mxu0 0.0
  %467 = vmatpush1.msra.mxu0 0.0
  %468 = vmatprep.subr.mxu0 0.0
  %469 = vmatpush1.msra.mxu0 0.0
  %470 = vmatprep.mubr.f32.mxu0 0.0
  %471 = vmatmul.mubr.f32.gmra.mrb[0].mxu0 %v404
  %v472 = vpop.f32.mrb[0].mxu0
  %v473 = vadd.f32 0.0, %v472
  %v474 = vpop.f32.mrb[0].mxu0
  %475 = vdwg.mxu0
  %v476 = vadd.f32 %v147, %v473
  %v477 = vtanh.pop %v476
  %478 = vst.msk [vmem:[#allocation2 + $0x18] sm:$0xff] %vm174, %v477
  %v480 = vsel %vm174, %v477, 0
  %482 = vmatprep.subr.mxu0 0.0
  %483 = vmatpush1.msra.mxu0 %v170
  %484 = vmatprep.subr.mxu0 0.0
  %485 = vmatpush1.msra.mxu0 %v171
  %486 = vmatprep.subr.mxu0 0.0
  %487 = vmatpush1.msra.mxu0 %v172
  %488 = vmatprep.subr.mxu0 0.0
  %489 = vmatpush1.msra.mxu0 %v173
  %490 = vmatprep.subr.mxu0 0.0
  %491 = vmatpush1.msra.mxu0 0.0
  %492 = vmatprep.subr.mxu0 0.0
  %493 = vmatpush1.msra.mxu0 0.0
  %494 = vmatprep.subr.mxu0 0.0
  %495 = vmatpush1.msra.mxu0 0.0
  %496 = vmatprep.subr.mxu0 0.0
  %497 = vmatpush1.msra.mxu0 0.0
  %498 = vmatprep.subr.mxu0 0.0
  %499 = vmatpush1.msra.mxu0 0.0
  %500 = vmatprep.subr.mxu0 0.0
  %501 = vmatpush1.msra.mxu0 0.0
  %502 = vmatprep.subr.mxu0 0.0
  %503 = vmatpush1.msra.mxu0 0.0
  %504 = vmatprep.subr.mxu0 0.0
  %505 = vmatpush1.msra.mxu0 0.0
  %506 = vmatprep.subr.mxu0 0.0
  %507 = vmatpush1.msra.mxu0 0.0
  %508 = vmatprep.subr.mxu0 0.0
  %509 = vmatpush1.msra.mxu0 0.0
  %510 = vmatprep.subr.mxu0 0.0
  %511 = vmatpush1.msra.mxu0 0.0
  %512 = vmatprep.subr.mxu0 0.0
  %513 = vmatpush1.msra.mxu0 0.0
  %514 = vmatprep.subr.mxu0 0.0
  %515 = vmatpush1.msra.mxu0 0.0
  %516 = vmatprep.subr.mxu0 0.0
  %517 = vmatpush1.msra.mxu0 0.0
  %518 = vmatprep.subr.mxu0 0.0
  %519 = vmatpush1.msra.mxu0 0.0
  %520 = vmatprep.subr.mxu0 0.0
  %521 = vmatpush1.msra.mxu0 0.0
  %522 = vmatprep.subr.mxu0 0.0
  %523 = vmatpush1.msra.mxu0 0.0
  %524 = vmatprep.subr.mxu0 0.0
  %525 = vmatpush1.msra.mxu0 0.0
  %526 = vmatprep.subr.mxu0 0.0
  %527 = vmatpush1.msra.mxu0 0.0
  %528 = vmatprep.subr.mxu0 0.0
  %529 = vmatpush1.msra.mxu0 0.0
  %530 = vmatprep.subr.mxu0 0.0
  %531 = vmatpush1.msra.mxu0 0.0
  %532 = vmatprep.subr.mxu0 0.0
  %533 = vmatpush1.msra.mxu0 0.0
  %534 = vmatprep.subr.mxu0 0.0
  %535 = vmatpush1.msra.mxu0 0.0
  %536 = vmatprep.subr.mxu0 0.0
  %537 = vmatpush1.msra.mxu0 0.0
  %538 = vmatprep.subr.mxu0 0.0
  %539 = vmatpush1.msra.mxu0 0.0
  %540 = vmatprep.subr.mxu0 0.0
  %541 = vmatpush1.msra.mxu0 0.0
  %542 = vmatprep.subr.mxu0 0.0
  %543 = vmatpush1.msra.mxu0 0.0
  %544 = vmatprep.subr.mxu0 0.0
  %545 = vmatpush1.msra.mxu0 0.0
  %546 = vmatprep.mubr.f32.mxu0 0.0
  %547 = vmatmul.mubr.f32.gmra.mrb[0].mxu0 %v480
  %v548 = vpop.f32.mrb[0].mxu0
  %v549 = vadd.f32 0.0, %v548
  %v550 = vpop.f32.mrb[0].mxu0
  %551 = vdwg.mxu0
  %v552 = vadd.f32 %v152, %v549
  %v553 = vtanh.pop %v552
  %554 = vst.msk [vmem:[#allocation2 + $0x20] sm:$0xff] %vm174, %v553
  %v556 = vsel %vm174, %v553, 0
  %558 = vmatprep.subr.mxu0 0.0
  %559 = vmatpush1.msra.mxu0 %v170
  %560 = vmatprep.subr.mxu0 0.0
  %561 = vmatpush1.msra.mxu0 %v171
  %562 = vmatprep.subr.mxu0 0.0
  %563 = vmatpush1.msra.mxu0 %v172
  %564 = vmatprep.subr.mxu0 0.0
  %565 = vmatpush1.msra.mxu0 %v173
  %566 = vmatprep.subr.mxu0 0.0
  %567 = vmatpush1.msra.mxu0 0.0
  %568 = vmatprep.subr.mxu0 0.0
  %569 = vmatpush1.msra.mxu0 0.0
  %570 = vmatprep.subr.mxu0 0.0
  %571 = vmatpush1.msra.mxu0 0.0
  %572 = vmatprep.subr.mxu0 0.0
  %573 = vmatpush1.msra.mxu0 0.0
  %574 = vmatprep.subr.mxu0 0.0
  %575 = vmatpush1.msra.mxu0 0.0
  %576 = vmatprep.subr.mxu0 0.0
  %577 = vmatpush1.msra.mxu0 0.0
  %578 = vmatprep.subr.mxu0 0.0
  %579 = vmatpush1.msra.mxu0 0.0
  %580 = vmatprep.subr.mxu0 0.0
  %581 = vmatpush1.msra.mxu0 0.0
  %582 = vmatprep.subr.mxu0 0.0
  %583 = vmatpush1.msra.mxu0 0.0
  %584 = vmatprep.subr.mxu0 0.0
  %585 = vmatpush1.msra.mxu0 0.0
  %586 = vmatprep.subr.mxu0 0.0
  %587 = vmatpush1.msra.mxu0 0.0
  %588 = vmatprep.subr.mxu0 0.0
  %589 = vmatpush1.msra.mxu0 0.0
  %590 = vmatprep.subr.mxu0 0.0
  %591 = vmatpush1.msra.mxu0 0.0
  %592 = vmatprep.subr.mxu0 0.0
  %593 = vmatpush1.msra.mxu0 0.0
  %594 = vmatprep.subr.mxu0 0.0
  %595 = vmatpush1.msra.mxu0 0.0
  %596 = vmatprep.subr.mxu0 0.0
  %597 = vmatpush1.msra.mxu0 0.0
  %598 = vmatprep.subr.mxu0 0.0
  %599 = vmatpush1.msra.mxu0 0.0
  %600 = vmatprep.subr.mxu0 0.0
  %601 = vmatpush1.msra.mxu0 0.0
  %602 = vmatprep.subr.mxu0 0.0
  %603 = vmatpush1.msra.mxu0 0.0
  %604 = vmatprep.subr.mxu0 0.0
  %605 = vmatpush1.msra.mxu0 0.0
  %606 = vmatprep.subr.mxu0 0.0
  %607 = vmatpush1.msra.mxu0 0.0
  %608 = vmatprep.subr.mxu0 0.0
  %609 = vmatpush1.msra.mxu0 0.0
  %610 = vmatprep.subr.mxu0 0.0
  %611 = vmatpush1.msra.mxu0 0.0
  %612 = vmatprep.subr.mxu0 0.0
  %613 = vmatpush1.msra.mxu0 0.0
  %614 = vmatprep.subr.mxu0 0.0
  %615 = vmatpush1.msra.mxu0 0.0
  %616 = vmatprep.subr.mxu0 0.0
  %617 = vmatpush1.msra.mxu0 0.0
  %618 = vmatprep.subr.mxu0 0.0
  %619 = vmatpush1.msra.mxu0 0.0
  %620 = vmatprep.subr.mxu0 0.0
  %621 = vmatpush1.msra.mxu0 0.0
  %622 = vmatprep.mubr.f32.mxu0 0.0
  %623 = vmatmul.mubr.f32.gmra.mrb[0].mxu0 %v556
  %v624 = vpop.f32.mrb[0].mxu0
  %v625 = vadd.f32 0.0, %v624
  %v626 = vpop.f32.mrb[0].mxu0
  %627 = vdwg.mxu0
  %v628 = vadd.f32 %v157, %v625
  %v629 = vtanh.pop %v628
  %630 = vst.msk [vmem:[#allocation2 + $0x28] sm:$0xff] %vm174, %v629
  %v632 = vsel %vm174, %v629, 0
  %634 = vmatprep.subr.mxu0 0.0
  %635 = vmatpush1.msra.mxu0 %v170
  %636 = vmatprep.subr.mxu0 0.0
  %637 = vmatpush1.msra.mxu0 %v171
  %638 = vmatprep.subr.mxu0 0.0
  %639 = vmatpush1.msra.mxu0 %v172
  %640 = vmatprep.subr.mxu0 0.0
  %641 = vmatpush1.msra.mxu0 %v173
  %642 = vmatprep.subr.mxu0 0.0
  %643 = vmatpush1.msra.mxu0 0.0
  %644 = vmatprep.subr.mxu0 0.0
  %645 = vmatpush1.msra.mxu0 0.0
  %646 = vmatprep.subr.mxu0 0.0
  %647 = vmatpush1.msra.mxu0 0.0
  %648 = vmatprep.subr.mxu0 0.0
  %649 = vmatpush1.msra.mxu0 0.0
  %650 = vmatprep.subr.mxu0 0.0
  %651 = vmatpush1.msra.mxu0 0.0
  %652 = vmatprep.subr.mxu0 0.0
  %653 = vmatpush1.msra.mxu0 0.0
  %654 = vmatprep.subr.mxu0 0.0
  %655 = vmatpush1.msra.mxu0 0.0
  %656 = vmatprep.subr.mxu0 0.0
  %657 = vmatpush1.msra.mxu0 0.0
  %658 = vmatprep.subr.mxu0 0.0
  %659 = vmatpush1.msra.mxu0 0.0
  %660 = vmatprep.subr.mxu0 0.0
  %661 = vmatpush1.msra.mxu0 0.0
  %662 = vmatprep.subr.mxu0 0.0
  %663 = vmatpush1.msra.mxu0 0.0
  %664 = vmatprep.subr.mxu0 0.0
  %665 = vmatpush1.msra.mxu0 0.0
  %666 = vmatprep.subr.mxu0 0.0
  %667 = vmatpush1.msra.mxu0 0.0
  %668 = vmatprep.subr.mxu0 0.0
  %669 = vmatpush1.msra.mxu0 0.0
  %670 = vmatprep.subr.mxu0 0.0
  %671 = vmatpush1.msra.mxu0 0.0
  %672 = vmatprep.subr.mxu0 0.0
  %673 = vmatpush1.msra.mxu0 0.0
  %674 = vmatprep.subr.mxu0 0.0
  %675 = vmatpush1.msra.mxu0 0.0
  %676 = vmatprep.subr.mxu0 0.0
  %677 = vmatpush1.msra.mxu0 0.0
  %678 = vmatprep.subr.mxu0 0.0
  %679 = vmatpush1.msra.mxu0 0.0
  %680 = vmatprep.subr.mxu0 0.0
  %681 = vmatpush1.msra.mxu0 0.0
  %682 = vmatprep.subr.mxu0 0.0
  %683 = vmatpush1.msra.mxu0 0.0
  %684 = vmatprep.subr.mxu0 0.0
  %685 = vmatpush1.msra.mxu0 0.0
  %686 = vmatprep.subr.mxu0 0.0
  %687 = vmatpush1.msra.mxu0 0.0
  %688 = vmatprep.subr.mxu0 0.0
  %689 = vmatpush1.msra.mxu0 0.0
  %690 = vmatprep.subr.mxu0 0.0
  %691 = vmatpush1.msra.mxu0 0.0
  %692 = vmatprep.subr.mxu0 0.0
  %693 = vmatpush1.msra.mxu0 0.0
  %694 = vmatprep.subr.mxu0 0.0
  %695 = vmatpush1.msra.mxu0 0.0
  %696 = vmatprep.subr.mxu0 0.0
  %697 = vmatpush1.msra.mxu0 0.0
  %698 = vmatprep.mubr.f32.mxu0 0.0
  %699 = vmatmul.mubr.f32.gmra.mrb[0].mxu0 %v632
  %v700 = vpop.f32.mrb[0].mxu0
  %v701 = vadd.f32 0.0, %v700
  %v702 = vpop.f32.mrb[0].mxu0
  %703 = vdwg.mxu0
  %v704 = vadd.f32 %v162, %v701
  %v705 = vtanh.pop %v704
  %706 = vst.msk [vmem:[#allocation2 + $0x30] sm:$0xff] %vm174, %v705
  %v708 = vsel %vm174, %v705, 0
  %710 = vmatprep.subr.mxu0 0.0
  %711 = vmatpush1.msra.mxu0 %v170
  %712 = vmatprep.subr.mxu0 0.0
  %713 = vmatpush1.msra.mxu0 %v171
  %714 = vmatprep.subr.mxu0 0.0
  %715 = vmatpush1.msra.mxu0 %v172
  %716 = vmatprep.subr.mxu0 0.0
  %717 = vmatpush1.msra.mxu0 %v173
  %718 = vmatprep.subr.mxu0 0.0
  %719 = vmatpush1.msra.mxu0 0.0
  %720 = vmatprep.subr.mxu0 0.0
  %721 = vmatpush1.msra.mxu0 0.0
  %722 = vmatprep.subr.mxu0 0.0
  %723 = vmatpush1.msra.mxu0 0.0
  %724 = vmatprep.subr.mxu0 0.0
  %725 = vmatpush1.msra.mxu0 0.0
  %726 = vmatprep.subr.mxu0 0.0
  %727 = vmatpush1.msra.mxu0 0.0
  %728 = vmatprep.subr.mxu0 0.0
  %729 = vmatpush1.msra.mxu0 0.0
  %730 = vmatprep.subr.mxu0 0.0
  %731 = vmatpush1.msra.mxu0 0.0
  %732 = vmatprep.subr.mxu0 0.0
  %733 = vmatpush1.msra.mxu0 0.0
  %734 = vmatprep.subr.mxu0 0.0
  %735 = vmatpush1.msra.mxu0 0.0
  %736 = vmatprep.subr.mxu0 0.0
  %737 = vmatpush1.msra.mxu0 0.0
  %738 = vmatprep.subr.mxu0 0.0
  %739 = vmatpush1.msra.mxu0 0.0
  %740 = vmatprep.subr.mxu0 0.0
  %741 = vmatpush1.msra.mxu0 0.0
  %742 = vmatprep.subr.mxu0 0.0
  %743 = vmatpush1.msra.mxu0 0.0
  %744 = vmatprep.subr.mxu0 0.0
  %745 = vmatpush1.msra.mxu0 0.0
  %746 = vmatprep.subr.mxu0 0.0
  %747 = vmatpush1.msra.mxu0 0.0
  %748 = vmatprep.subr.mxu0 0.0
  %749 = vmatpush1.msra.mxu0 0.0
  %750 = vmatprep.subr.mxu0 0.0
  %751 = vmatpush1.msra.mxu0 0.0
  %752 = vmatprep.subr.mxu0 0.0
  %753 = vmatpush1.msra.mxu0 0.0
  %754 = vmatprep.subr.mxu0 0.0
  %755 = vmatpush1.msra.mxu0 0.0
  %756 = vmatprep.subr.mxu0 0.0
  %757 = vmatpush1.msra.mxu0 0.0
  %758 = vmatprep.subr.mxu0 0.0
  %759 = vmatpush1.msra.mxu0 0.0
  %760 = vmatprep.subr.mxu0 0.0
  %761 = vmatpush1.msra.mxu0 0.0
  %762 = vmatprep.subr.mxu0 0.0
  %763 = vmatpush1.msra.mxu0 0.0
  %764 = vmatprep.subr.mxu0 0.0
  %765 = vmatpush1.msra.mxu0 0.0
  %766 = vmatprep.subr.mxu0 0.0
  %767 = vmatpush1.msra.mxu0 0.0
  %768 = vmatprep.subr.mxu0 0.0
  %769 = vmatpush1.msra.mxu0 0.0
  %770 = vmatprep.subr.mxu0 0.0
  %771 = vmatpush1.msra.mxu0 0.0
  %772 = vmatprep.subr.mxu0 0.0
  %773 = vmatpush1.msra.mxu0 0.0
  %774 = vmatprep.mubr.f32.mxu0 0.0
  %775 = vmatmul.mubr.f32.gmra.mrb[0].mxu0 %v708
  %v776 = vpop.f32.mrb[0].mxu0
  %v777 = vadd.f32 0.0, %v776
  %v778 = vpop.f32.mrb[0].mxu0
  %779 = vdwg.mxu0
  %v780 = vadd.f32 %v167, %v777
  %v781 = vtanh.pop %v780
  %782 = vst.msk [vmem:[#allocation2 + $0x38] sm:$0xff] %vm174, %v781
  %v783 = vld [vmem:[#allocation2] sm:$0xff]
  %v784 = vld [vmem:[#allocation2 + $0x8] sm:$0xff]
  %v785 = vld [vmem:[#allocation2 + $0x10] sm:$0xff]
  %v786 = vld [vmem:[#allocation2 + $0x18] sm:$0xff]
  %v787 = vld [vmem:[#allocation2 + $0x20] sm:$0xff]
  %v788 = vld [vmem:[#allocation2 + $0x28] sm:$0xff]
  %v789 = vld [vmem:[#allocation2 + $0x30] sm:$0xff]
  %v790 = vld [vmem:[#allocation2 + $0x38] sm:$0xff]
  %v791 = vld [vmem:[%s4] sm:$0xff]
  %v792 = vld [vmem:[%s4 + $0x8] sm:$0xff]
  %v793 = vld [vmem:[%s4 + $0x10] sm:$0xff]
  %v794 = vld [vmem:[%s4 + $0x18] sm:$0xff]
  %v795 = vld [vmem:[%s5] sm:$0x1]
  %v797 = vlaneseq
  %v798 = vshrl.u32 %v797, 7
  %v799 = vsub.s32 0, %v798
  %v800 = vrot.slane %v795, %v799
  %v803 = vsel %vm174, %v783, 0
  %v806 = vsel %vm174, %v784, 0
  %v809 = vsel %vm174, %v785, 0
  %v812 = vsel %vm174, %v786, 0
  %v815 = vsel %vm174, %v787, 0
  %v818 = vsel %vm174, %v788, 0
  %v821 = vsel %vm174, %v789, 0
  %v824 = vsel %vm174, %v790, 0
  %826 = vmatprep.subr.mxu0 0.0
  %827 = vmatpush1.msra.mxu0 %v791
  %828 = vmatprep.subr.mxu0 0.0
  %829 = vmatpush1.msra.mxu0 %v792
  %830 = vmatprep.subr.mxu0 0.0
  %831 = vmatpush1.msra.mxu0 %v793
  %832 = vmatprep.subr.mxu0 0.0
  %833 = vmatpush1.msra.mxu0 %v794
  %834 = vmatprep.subr.mxu0 0.0
  %835 = vmatpush1.msra.mxu0 0.0
  %836 = vmatprep.subr.mxu0 0.0
  %837 = vmatpush1.msra.mxu0 0.0
  %838 = vmatprep.subr.mxu0 0.0
  %839 = vmatpush1.msra.mxu0 0.0
  %840 = vmatprep.subr.mxu0 0.0
  %841 = vmatpush1.msra.mxu0 0.0
  %842 = vmatprep.subr.mxu0 0.0
  %843 = vmatpush1.msra.mxu0 0.0
  %844 = vmatprep.subr.mxu0 0.0
  %845 = vmatpush1.msra.mxu0 0.0
  %846 = vmatprep.subr.mxu0 0.0
  %847 = vmatpush1.msra.mxu0 0.0
  %848 = vmatprep.subr.mxu0 0.0
  %849 = vmatpush1.msra.mxu0 0.0
  %850 = vmatprep.subr.mxu0 0.0
  %851 = vmatpush1.msra.mxu0 0.0
  %852 = vmatprep.subr.mxu0 0.0
  %853 = vmatpush1.msra.mxu0 0.0
  %854 = vmatprep.subr.mxu0 0.0
  %855 = vmatpush1.msra.mxu0 0.0
  %856 = vmatprep.subr.mxu0 0.0
  %857 = vmatpush1.msra.mxu0 0.0
  %858 = vmatprep.subr.mxu0 0.0
  %859 = vmatpush1.msra.mxu0 0.0
  %860 = vmatprep.subr.mxu0 0.0
  %861 = vmatpush1.msra.mxu0 0.0
  %862 = vmatprep.subr.mxu0 0.0
  %863 = vmatpush1.msra.mxu0 0.0
  %864 = vmatprep.subr.mxu0 0.0
  %865 = vmatpush1.msra.mxu0 0.0
  %866 = vmatprep.subr.mxu0 0.0
  %867 = vmatpush1.msra.mxu0 0.0
  %868 = vmatprep.subr.mxu0 0.0
  %869 = vmatpush1.msra.mxu0 0.0
  %870 = vmatprep.subr.mxu0 0.0
  %871 = vmatpush1.msra.mxu0 0.0
  %872 = vmatprep.subr.mxu0 0.0
  %873 = vmatpush1.msra.mxu0 0.0
  %874 = vmatprep.subr.mxu0 0.0
  %875 = vmatpush1.msra.mxu0 0.0
  %876 = vmatprep.subr.mxu0 0.0
  %877 = vmatpush1.msra.mxu0 0.0
  %878 = vmatprep.subr.mxu0 0.0
  %879 = vmatpush1.msra.mxu0 0.0
  %880 = vmatprep.subr.mxu0 0.0
  %881 = vmatpush1.msra.mxu0 0.0
  %882 = vmatprep.subr.mxu0 0.0
  %883 = vmatpush1.msra.mxu0 0.0
  %884 = vmatprep.subr.mxu0 0.0
  %885 = vmatpush1.msra.mxu0 0.0
  %886 = vmatprep.subr.mxu0 0.0
  %887 = vmatpush1.msra.mxu0 0.0
  %888 = vmatprep.subr.mxu0 0.0
  %889 = vmatpush1.msra.mxu0 0.0
  %890 = vmatprep.mubr.f32.mxu0 0.0
  %891 = vmatmul.mubr.f32.gmra.mrb[0].mxu0 %v803
  %v892 = vpop.f32.mrb[0].mxu0
  %v893 = vadd.f32 %v800, %v892
  %v894 = vpop.f32.mrb[0].mxu0
  %895 = vmatprep.mubr.f32.mxu0 0.0
  %896 = vmatmul.mubr.f32.gmra.mrb[0].mxu0 %v806
  %v897 = vpop.f32.mrb[0].mxu0
  %v898 = vadd.f32 %v800, %v897
  %v899 = vpop.f32.mrb[0].mxu0
  %900 = vmatprep.mubr.f32.mxu0 0.0
  %901 = vmatmul.mubr.f32.gmra.mrb[0].mxu0 %v809
  %v902 = vpop.f32.mrb[0].mxu0
  %v903 = vadd.f32 %v800, %v902
  %v904 = vpop.f32.mrb[0].mxu0
  %905 = vmatprep.mubr.f32.mxu0 0.0
  %906 = vmatmul.mubr.f32.gmra.mrb[0].mxu0 %v812
  %v907 = vpop.f32.mrb[0].mxu0
  %v908 = vadd.f32 %v800, %v907
  %v909 = vpop.f32.mrb[0].mxu0
  %910 = vmatprep.mubr.f32.mxu0 0.0
  %911 = vmatmul.mubr.f32.gmra.mrb[0].mxu0 %v815
  %v912 = vpop.f32.mrb[0].mxu0
  %v913 = vadd.f32 %v800, %v912
  %v914 = vpop.f32.mrb[0].mxu0
  %915 = vmatprep.mubr.f32.mxu0 0.0
  %916 = vmatmul.mubr.f32.gmra.mrb[0].mxu0 %v818
  %v917 = vpop.f32.mrb[0].mxu0
  %v918 = vadd.f32 %v800, %v917
  %v919 = vpop.f32.mrb[0].mxu0
  %920 = vmatprep.mubr.f32.mxu0 0.0
  %921 = vmatmul.mubr.f32.gmra.mrb[0].mxu0 %v821
  %v922 = vpop.f32.mrb[0].mxu0
  %v923 = vadd.f32 %v800, %v922
  %v924 = vpop.f32.mrb[0].mxu0
  %925 = vmatprep.mubr.f32.mxu0 0.0
  %926 = vmatmul.mubr.f32.gmra.mrb[0].mxu0 %v824
  %v927 = vpop.f32.mrb[0].mxu0
  %v928 = vadd.f32 %v800, %v927
  %v929 = vpop.f32.mrb[0].mxu0
  %930 = vdwg.mxu0
  %vm931 = vcmask 64512
  %932 = vst.msk [vmem:[%s6] sm:$0xff] %vm931, %v893
  %933 = vst.msk [vmem:[%s6 + $0x8] sm:$0xff] %vm931, %v898
  %934 = vst.msk [vmem:[%s6 + $0x10] sm:$0xff] %vm931, %v903
  %935 = vst.msk [vmem:[%s6 + $0x18] sm:$0xff] %vm931, %v908
  %936 = vst.msk [vmem:[%s6 + $0x20] sm:$0xff] %vm931, %v913
  %937 = vst.msk [vmem:[%s6 + $0x28] sm:$0xff] %vm931, %v918
  %938 = vst.msk [vmem:[%s6 + $0x30] sm:$0xff] %vm931, %v923
  %939 = vst.msk [vmem:[%s6 + $0x38] sm:$0xff] %vm931, %v928
  // Predicated region
  $region26: #{tpu_custom_call.1} parent=0 // pred_check
    _
  $region27: #{tpu_custom_call.1} parent=0 // pred_check_branch
    %941 = sbr.rel (0) target = $region29
  $region28: #{tpu_custom_call.1} parent=0 // pred_region
    _
  $region29: #{tpu_custom_call.1} parent=0 // pred_fallthru
    _
  // Predicated region
  $region30: #{tpu_custom_call.1} parent=0 // pred_check
    _
  $region31: #{tpu_custom_call.1} parent=0 // pred_check_branch
    %943 = sbr.rel (0) target = $region33
  $region32: #{tpu_custom_call.1} parent=0 // pred_region
    _
  $region33: #{tpu_custom_call.1} parent=0 // pred_fallthru
    _

</llo_original>
